<compile_context>
chip_gen: v5e
topology: v5e:2x2
jax: 0.10.0
libtpu: 0.0.40
codegen_flags: <defaults>
</compile_context>

<pallas_src>
import jax
import jax.numpy as jnp
from jax import lax
from jax.experimental import pallas as pl
from jax.experimental.pallas import tpu as pltpu


VMEM_BUDGET_BYTES = 48 * 1024 * 1024      # conservative for v7x (64 MiB phys)
VMEM_LIMIT_CAP = 60 * 1024 * 1024


def make_gru_kernel(tb, hidden_dim, packed_out, compute_dtype):
    """GRU chunk kernel processing `tb` timesteps per grid step."""
    H = hidden_dim

    def gru_kernel(gi_ref, whh_ref, bhn_ref, out_ref, h_scr):
        # gi_ref  : (tb, bb, 3H)  x @ W_ih + b_ih + [b_hr, b_hz, 0], time-major
        # whh_ref : (H, 3H)       packed hidden weights (r, z, n), single copy
        # bhn_ref : (1, H)        b_hn (must be applied inside the r product)
        # out_ref : (tb, bb, H)   dense path   OR  (1, bb, tb*H) packed path
        # h_scr   : VMEM (bb, H)  f32 recurrent carry, persists across chunks
        c = pl.program_id(1)  # time-chunk axis (sequential / "arbitrary")

        @pl.when(c == 0)
        def _():
            h_scr[...] = jnp.zeros_like(h_scr)

        # Hoist constant operands out of the unrolled loop.
        w_rz = whh_ref[:, : 2 * H]        # (H, 2H)
        w_n = whh_ref[:, 2 * H:]          # (H, H)
        b_hn = bhn_ref[...]               # (1, H) f32

        h = h_scr[...]                    # (bb, H) f32 carry
        hs = []

        # Fully unrolled recurrence over the chunk; all indices are static.
        for j in range(tb):
            gi_t = gi_ref[j]              # (bb, 3H), lane-dense load
            h_mxu = h.astype(compute_dtype)

            # r/z columns first; their sigmoids (EUP) overlap the second dot.
            gh_rz = jnp.dot(h_mxu, w_rz, preferred_element_type=jnp.float32)
            r = jax.nn.sigmoid(gi_t[:, 0:H] + gh_rz[:, 0:H])
            z = jax.nn.sigmoid(gi_t[:, H:2 * H] + gh_rz[:, H:])

            gh_n = jnp.dot(h_mxu, w_n, preferred_element_type=jnp.float32)
            n = jnp.tanh(gi_t[:, 2 * H:] + r * (gh_n + b_hn))

            h = n + z * (h - n)           # == (1 - z) * n + z * h

            if packed_out:
                hs.append(h)
            else:
                out_ref[j] = h.astype(out_ref.dtype)

        if packed_out:
            # One lane-dense (bb, tb*H) store per chunk (H < 128 configs).
            out_ref[0] = jnp.concatenate(hs, axis=-1).astype(out_ref.dtype)

        h_scr[...] = h                    # carry into the next chunk

    return gru_kernel


def _vmem_estimate(bb, tb, H, gi_bytes, out_bytes, w_bytes):
    gi_block = bb * tb * 3 * H * gi_bytes
    out_block = bb * tb * H * out_bytes
    weights = H * 3 * H * w_bytes + H * 4          # single-buffered whh + b_hn
    scratch = bb * H * 4
    return 2 * gi_block + 2 * out_block + weights + scratch


def gru_pallas(x, w_ih3, w_hh3, b_ih3, b_hh3, *, tb=None, bb=None,
               compute_dtype=jnp.float32):
    """x: (B, T, E); packed weights (E,3H)/(H,3H)/(3H,)/(3H,), gate order r,z,n.

    Returns (output (B, T, H), hidden (B, H))."""
    B, T, E = x.shape
    H = w_hh3.shape[0]
    cbytes = jnp.dtype(compute_dtype).itemsize

    # --- Batch tile: never tile below B; only split for megacore when each
    # half still reasonably fills the MXU M dimension (v7x guidance). ---
    if bb is None:
        bb = B // 2 if (B % 2 == 0 and B // 2 >= 256) else B
    if B % bb != 0:
        bb = B
    nb = B // bb

    # --- Time-chunk size from an explicit VMEM byte budget. ---
    if tb is None:
        tb = min(T, 8)
        for cand in (64, 32, 16, 8):
            if cand <= T and _vmem_estimate(bb, cand, H, cbytes, 4,
                                            cbytes) <= VMEM_BUDGET_BYTES:
                tb = cand
                break
    n_chunks = pl.cdiv(T, tb)
    t_pad = n_chunks * tb

    # --- Hoisted input projection (time-major), with r/z hidden-bias folded.
    # b_hn is NOT folded: PyTorch applies it inside the r-gate product. ---
    b_fold = (b_ih3 + jnp.concatenate(
        [b_hh3[:2 * H], jnp.zeros((H,), b_hh3.dtype)])).astype(jnp.float32)
    x_tm = jnp.transpose(x, (1, 0, 2))                       # (T, B, E)
    gi = (jnp.dot(x_tm.reshape(T * B, E).astype(compute_dtype),
                  w_ih3.astype(compute_dtype),
                  preferred_element_type=jnp.float32)
          + b_fold).reshape(T, B, 3 * H).astype(compute_dtype)
    if t_pad != T:
        # Zero-pad time; padded steps only produce discarded rows.
        gi = jnp.pad(gi, ((0, t_pad - T), (0, 0), (0, 0)))

    whh = w_hh3.astype(compute_dtype)                        # (H, 3H)
    bhn = b_hh3[2 * H:].reshape(1, H).astype(jnp.float32)    # (1, H)

    # --- Output layout: lane-dense packed store when H is not 128-aligned. ---
    packed_out = (H % 128 != 0 and (tb * H) % 128 == 0
                  and bb * tb * H * 4 <= (1 << 20))
    if packed_out:
        out_shape = jax.ShapeDtypeStruct((n_chunks, B, tb * H), jnp.float32)
        out_spec = pl.BlockSpec((1, bb, tb * H), lambda b, c: (c, b, 0))
    else:
        out_shape = jax.ShapeDtypeStruct((t_pad, B, H), jnp.float32)
        out_spec = pl.BlockSpec((tb, bb, H), lambda b, c: (c, b, 0))

    est = _vmem_estimate(bb, tb, H, cbytes, 4, cbytes)
    vmem_limit = int(min(VMEM_LIMIT_CAP, max(32 * 1024 * 1024, 2 * est)))

    out_raw = pl.pallas_call(
        make_gru_kernel(tb, H, packed_out, compute_dtype),
        out_shape=out_shape,
        grid_spec=pltpu.PrefetchScalarGridSpec(
            num_scalar_prefetch=0,
            grid=(nb, n_chunks),
            in_specs=[
                # time-major gi, pipelined across chunks
                pl.BlockSpec((tb, bb, 3 * H), lambda b, c: (c, b, 0)),
                # constant operands: whole array, single VMEM copy
                pl.BlockSpec(memory_space=pltpu.MemorySpace.VMEM),
                pl.BlockSpec(memory_space=pltpu.MemorySpace.VMEM),
            ],
            out_specs=out_spec,
            scratch_shapes=[pltpu.VMEM((bb, H), jnp.float32)],
        ),
        compiler_params=pltpu.CompilerParams(
            # batch tiles independent; time chunks are a sequential recurrence
            dimension_semantics=("parallel", "arbitrary"),
            vmem_limit_bytes=vmem_limit),
    )(gi, whh, bhn)

    if packed_out:
        output = (out_raw.reshape(n_chunks, B, tb, H)
                  .transpose(1, 0, 2, 3).reshape(B, t_pad, H))[:, :T, :]
    else:
        output = jnp.transpose(out_raw, (1, 0, 2))[:, :T, :]

    hidden = output[:, T - 1, :]   # last step of 1-layer unidirectional GRU
    return output, hidden


class Args:
    def __init__(self, bert_hidden_size, max_seq_length):
        self.bert_hidden_size = bert_hidden_size
        self.max_seq_length = max_seq_length


def gru_module_forward(x, params, args):
    """Mirrors GRU.forward of the PyTorch module (n_layers=1, unidirectional)."""
    output, hidden = gru_pallas(x, *params)
    # nn.GRU hidden is (1, B, H); .view(-1, bert_hidden_size) -> (B, H)
    hidden = hidden.reshape(-1, args.bert_hidden_size)
    output = output.reshape(-1, args.max_seq_length, args.bert_hidden_size)
    return output, hidden


def init_gru_params(key, embedding_dim, hidden_dim):
    """Deterministic init matching nn.GRU shapes: U(-1/sqrt(H), 1/sqrt(H)).

    Returns gate-packed params: W_ih (E, 3H), W_hh (H, 3H), b_ih (3H,),
    b_hh (3H,), with PyTorch gate order (r, z, n) along the 3H axis."""
    k = 1.0 / jnp.sqrt(jnp.float32(hidden_dim))
    k1, k2, k3, k4 = jax.random.split(key, 4)
    # PyTorch native shapes: weight_ih_l0 (3H, E), weight_hh_l0 (3H, H).
    w_ih_pt = jax.random.uniform(k1, (3 * hidden_dim, embedding_dim),
                                 jnp.float32, -k, k)
    w_hh_pt = jax.random.uniform(k2, (3 * hidden_dim, hidden_dim),
                                 jnp.float32, -k, k)
    b_ih_pt = jax.random.uniform(k3, (3 * hidden_dim,), jnp.float32, -k, k)
    b_hh_pt = jax.random.uniform(k4, (3 * hidden_dim,), jnp.float32, -k, k)
    # Packed layout: simple transpose keeps the (r, z, n) column order.
    return w_ih_pt.T, w_hh_pt.T, b_ih_pt, b_hh_pt


def gru_reference(x, w_ih3, w_hh3, b_ih3, b_hh3):
    """Pure-JAX reference (lax.scan) implementing the PyTorch GRU equations."""
    B, T, E = x.shape
    H = w_hh3.shape[0]

    def cell(h, x_t):
        gi = x_t @ w_ih3 + b_ih3
        gh = h @ w_hh3 + b_hh3
        r = jax.nn.sigmoid(gi[:, :H] + gh[:, :H])
        z = jax.nn.sigmoid(gi[:, H:2 * H] + gh[:, H:2 * H])
        n = jnp.tanh(gi[:, 2 * H:] + r * gh[:, 2 * H:])
        h_new = (1.0 - z) * n + z * h
        return h_new, h_new

    h0 = jnp.zeros((B, H), jnp.float32)
    h_last, ys = lax.scan(cell, h0, jnp.transpose(x, (1, 0, 2)))
    return jnp.transpose(ys, (1, 0, 2)), h_last


if __name__ == "__main__":
    # --- Config 1: packed lane-dense store path (H < 128), small shapes. ---
    B, T, E, H = 2, 8, 32, 32
    args = Args(bert_hidden_size=H, max_seq_length=T)
    key = jax.random.PRNGKey(0)
    k_x, k_p = jax.random.split(key)
    x = jax.random.normal(k_x, (B, T, E), jnp.float32)
    params = init_gru_params(k_p, E, H)

    output, hidden = jax.jit(
        lambda x, p: gru_module_forward(x, p, args))(x, params)
    jax.block_until_ready((output, hidden))

    ref_out, ref_hid = gru_reference(x, *params)
    assert output.shape == (B, T, H) and hidden.shape == (B, H)
    assert jnp.allclose(output, ref_out, atol=1e-5, rtol=1e-5)
    assert jnp.allclose(hidden, ref_hid, atol=1e-5, rtol=1e-5)

    # --- Config 2: dense per-step store path (H % 128 == 0) + time padding. ---
    B2, T2, E2, H2 = 2, 12, 32, 128
    args2 = Args(bert_hidden_size=H2, max_seq_length=T2)
    k_x2, k_p2 = jax.random.split(jax.random.PRNGKey(1))
    x2 = jax.random.normal(k_x2, (B2, T2, E2), jnp.float32)
    params2 = init_gru_params(k_p2, E2, H2)
    out2, hid2 = jax.jit(
        lambda x, p: gru_module_forward(x, p, args2))(x2, params2)
    jax.block_until_ready((out2, hid2))
    ref_out2, ref_hid2 = gru_reference(x2, *params2)
    assert jnp.allclose(out2, ref_out2, atol=1e-5, rtol=1e-5)
    assert jnp.allclose(hid2, ref_hid2, atol=1e-5, rtol=1e-5)

    # --- bf16 MXU path (production default on v5e/v6e/v7x), loose tolerance. ---
    out_bf, hid_bf = jax.jit(
        lambda x, p: gru_pallas(x, *p, compute_dtype=jnp.bfloat16))(x, params)
    jax.block_until_ready((out_bf, hid_bf))
    assert float(jnp.max(jnp.abs(out_bf - ref_out))) < 0.1
    assert float(jnp.max(jnp.abs(hid_bf - ref_hid))) < 0.1

    print("KERNEL_OK")
</pallas_src>

<mosaic_0001>
module attributes {stable_mosaic.version = 11 : i64} {
  func.func @gru_kernel(%arg0: i32, %arg1: i32, %arg2: memref<8x2x96xf32, #tpu.memory_space<vmem>>, %arg3: memref<32x96xf32, #tpu.memory_space<vmem>>, %arg4: memref<1x32xf32, #tpu.memory_space<vmem>>, %arg5: memref<1x2x256xf32, #tpu.memory_space<vmem>>, %arg6: memref<2x32xf32, #tpu.memory_space<vmem>>) attributes {dimension_semantics = [#tpu.dimension_semantics<parallel>, #tpu.dimension_semantics<arbitrary>], iteration_bounds = array<i64: 1, 1>, scalar_prefetch = 0 : i64, scratch_operands = 1 : i64, tpu.core_type = #tpu.core_type<tc>, window_params = [{transform_indices = @transform_0, window_bounds = array<i64: 8, 2, 96>}, {pipeline_mode = #tpu.pipeline_mode<synchronous>, transform_indices = @transform_1, window_bounds = array<i64: 32, 96>}, {pipeline_mode = #tpu.pipeline_mode<synchronous>, transform_indices = @transform_2, window_bounds = array<i64: 1, 32>}, {transform_indices = @transform_3, window_bounds = array<i64: 1, 2, 256>}]} {
    %c0_i32 = arith.constant 0 : i32
    %0 = arith.cmpi eq, %arg1, %c0_i32 : i32
    %1 = arith.extui %0 : i1 to i32
    %c0_i32_0 = arith.constant 0 : i32
    %2 = arith.cmpi ne, %1, %c0_i32_0 : i32
    scf.if %2 {
      %cst_60 = arith.constant 0.000000e+00 : f32
      %244 = vector.broadcast %cst_60 : f32 to vector<2x32xf32>
      %c0_61 = arith.constant 0 : index
      %c0_62 = arith.constant 0 : index
      %245 = vector.load %arg6[%c0_61, %c0_62] : memref<2x32xf32, #tpu.memory_space<vmem>>, vector<2x32xf32>
      tpu.vector_store %arg6[%c0_61, %c0_62], %244 {strides = array<i32>} : memref<2x32xf32, #tpu.memory_space<vmem>>, vector<2x32xf32>,
    } else {
    }
    %c0 = arith.constant 0 : index
    %c0_1 = arith.constant 0 : index
    %3 = vector.load %arg3[%c0, %c0_1] : memref<32x96xf32, #tpu.memory_space<vmem>>, vector<32x64xf32>
    %c0_2 = arith.constant 0 : index
    %c64 = arith.constant 64 : index
    %4 = vector.load %arg3[%c0_2, %c64] : memref<32x96xf32, #tpu.memory_space<vmem>>, vector<32x32xf32>
    %c0_3 = arith.constant 0 : index
    %c0_4 = arith.constant 0 : index
    %5 = vector.load %arg4[%c0_3, %c0_4] : memref<1x32xf32, #tpu.memory_space<vmem>>, vector<1x32xf32>
    %c0_5 = arith.constant 0 : index
    %c0_6 = arith.constant 0 : index
    %6 = vector.load %arg6[%c0_5, %c0_6] : memref<2x32xf32, #tpu.memory_space<vmem>>, vector<2x32xf32>
    %c0_7 = arith.constant 0 : index
    %c0_8 = arith.constant 0 : index
    %c0_9 = arith.constant 0 : index
    %7 = vector.load %arg2[%c0_7, %c0_8, %c0_9] : memref<8x2x96xf32, #tpu.memory_space<vmem>>, vector<1x2x96xf32>
    %8 = vector.shape_cast %7 : vector<1x2x96xf32> to vector<2x96xf32>
    %cst = arith.constant dense<0.000000e+00> : vector<2x64xf32>
    %9 = tpu.matmul %6, %3, %cst {dimension_numbers = #tpu.dot_dimension_numbers<[1], [0], [0], [1], [0, 0, 1, 1], [], []>} : vector<2x32xf32>, vector<32x64xf32>, vector<2x64xf32> -> vector<2x64xf32>
    %10 = vector.extract_strided_slice %8 {offsets = [0, 0], sizes = [2, 32], strides = [1, 1]} : vector<2x96xf32> to vector<2x32xf32>
    %11 = vector.extract_strided_slice %9 {offsets = [0, 0], sizes = [2, 32], strides = [1, 1]} : vector<2x64xf32> to vector<2x32xf32>
    %12 = arith.addf %10, %11 : vector<2x32xf32>
    %13 = arith.negf %12 : vector<2x32xf32>
    %14 = math.exp %13 : vector<2x32xf32>
    %cst_10 = arith.constant 1.000000e+00 : f32
    %15 = vector.broadcast %cst_10 : f32 to vector<2x32xf32>
    %16 = arith.addf %15, %14 : vector<2x32xf32>
    %17 = arith.divf %15, %16 : vector<2x32xf32>
    %18 = vector.extract_strided_slice %8 {offsets = [0, 32], sizes = [2, 32], strides = [1, 1]} : vector<2x96xf32> to vector<2x32xf32>
    %19 = vector.extract_strided_slice %9 {offsets = [0, 32], sizes = [2, 32], strides = [1, 1]} : vector<2x64xf32> to vector<2x32xf32>
    %20 = arith.addf %18, %19 : vector<2x32xf32>
    %21 = arith.negf %20 : vector<2x32xf32>
    %22 = math.exp %21 : vector<2x32xf32>
    %cst_11 = arith.constant 1.000000e+00 : f32
    %23 = vector.broadcast %cst_11 : f32 to vector<2x32xf32>
    %24 = arith.addf %23, %22 : vector<2x32xf32>
    %25 = arith.divf %23, %24 : vector<2x32xf32>
    %cst_12 = arith.constant dense<0.000000e+00> : vector<2x32xf32>
    %26 = tpu.matmul %6, %4, %cst_12 {dimension_numbers = #tpu.dot_dimension_numbers<[1], [0], [0], [1], [0, 0, 1, 1], [], []>} : vector<2x32xf32>, vector<32x32xf32>, vector<2x32xf32> -> vector<2x32xf32>
    %27 = vector.extract_strided_slice %8 {offsets = [0, 64], sizes = [2, 32], strides = [1, 1]} : vector<2x96xf32> to vector<2x32xf32>
    %28 = vector.broadcast %5 : vector<1x32xf32> to vector<2x32xf32>
    %29 = arith.addf %26, %28 : vector<2x32xf32>
    %30 = arith.mulf %17, %29 : vector<2x32xf32>
    %31 = arith.addf %27, %30 : vector<2x32xf32>
    %32 = math.tanh %31 : vector<2x32xf32>
    %33 = arith.subf %6, %32 : vector<2x32xf32>
    %34 = arith.mulf %25, %33 : vector<2x32xf32>
    %35 = arith.addf %32, %34 : vector<2x32xf32>
    %c1 = arith.constant 1 : index
    %c0_13 = arith.constant 0 : index
    %c0_14 = arith.constant 0 : index
    %36 = vector.load %arg2[%c1, %c0_13, %c0_14] : memref<8x2x96xf32, #tpu.memory_space<vmem>>, vector<1x2x96xf32>
    %37 = vector.shape_cast %36 : vector<1x2x96xf32> to vector<2x96xf32>
    %cst_15 = arith.constant dense<0.000000e+00> : vector<2x64xf32>
    %38 = tpu.matmul %35, %3, %cst_15 {dimension_numbers = #tpu.dot_dimension_numbers<[1], [0], [0], [1], [0, 0, 1, 1], [], []>} : vector<2x32xf32>, vector<32x64xf32>, vector<2x64xf32> -> vector<2x64xf32>
    %39 = vector.extract_strided_slice %37 {offsets = [0, 0], sizes = [2, 32], strides = [1, 1]} : vector<2x96xf32> to vector<2x32xf32>
    %40 = vector.extract_strided_slice %38 {offsets = [0, 0], sizes = [2, 32], strides = [1, 1]} : vector<2x64xf32> to vector<2x32xf32>
    %41 = arith.addf %39, %40 : vector<2x32xf32>
    %42 = arith.negf %41 : vector<2x32xf32>
    %43 = math.exp %42 : vector<2x32xf32>
    %cst_16 = arith.constant 1.000000e+00 : f32
    %44 = vector.broadcast %cst_16 : f32 to vector<2x32xf32>
    %45 = arith.addf %44, %43 : vector<2x32xf32>
    %46 = arith.divf %44, %45 : vector<2x32xf32>
    %47 = vector.extract_strided_slice %37 {offsets = [0, 32], sizes = [2, 32], strides = [1, 1]} : vector<2x96xf32> to vector<2x32xf32>
    %48 = vector.extract_strided_slice %38 {offsets = [0, 32], sizes = [2, 32], strides = [1, 1]} : vector<2x64xf32> to vector<2x32xf32>
    %49 = arith.addf %47, %48 : vector<2x32xf32>
    %50 = arith.negf %49 : vector<2x32xf32>
    %51 = math.exp %50 : vector<2x32xf32>
    %cst_17 = arith.constant 1.000000e+00 : f32
    %52 = vector.broadcast %cst_17 : f32 to vector<2x32xf32>
    %53 = arith.addf %52, %51 : vector<2x32xf32>
    %54 = arith.divf %52, %53 : vector<2x32xf32>
    %cst_18 = arith.constant dense<0.000000e+00> : vector<2x32xf32>
    %55 = tpu.matmul %35, %4, %cst_18 {dimension_numbers = #tpu.dot_dimension_numbers<[1], [0], [0], [1], [0, 0, 1, 1], [], []>} : vector<2x32xf32>, vector<32x32xf32>, vector<2x32xf32> -> vector<2x32xf32>
    %56 = vector.extract_strided_slice %37 {offsets = [0, 64], sizes = [2, 32], strides = [1, 1]} : vector<2x96xf32> to vector<2x32xf32>
    %57 = vector.broadcast %5 : vector<1x32xf32> to vector<2x32xf32>
    %58 = arith.addf %55, %57 : vector<2x32xf32>
    %59 = arith.mulf %46, %58 : vector<2x32xf32>
    %60 = arith.addf %56, %59 : vector<2x32xf32>
    %61 = math.tanh %60 : vector<2x32xf32>
    %62 = arith.subf %35, %61 : vector<2x32xf32>
    %63 = arith.mulf %54, %62 : vector<2x32xf32>
    %64 = arith.addf %61, %63 : vector<2x32xf32>
    %c2 = arith.constant 2 : index
    %c0_19 = arith.constant 0 : index
    %c0_20 = arith.constant 0 : index
    %65 = vector.load %arg2[%c2, %c0_19, %c0_20] : memref<8x2x96xf32, #tpu.memory_space<vmem>>, vector<1x2x96xf32>
    %66 = vector.shape_cast %65 : vector<1x2x96xf32> to vector<2x96xf32>
    %cst_21 = arith.constant dense<0.000000e+00> : vector<2x64xf32>
    %67 = tpu.matmul %64, %3, %cst_21 {dimension_numbers = #tpu.dot_dimension_numbers<[1], [0], [0], [1], [0, 0, 1, 1], [], []>} : vector<2x32xf32>, vector<32x64xf32>, vector<2x64xf32> -> vector<2x64xf32>
    %68 = vector.extract_strided_slice %66 {offsets = [0, 0], sizes = [2, 32], strides = [1, 1]} : vector<2x96xf32> to vector<2x32xf32>
    %69 = vector.extract_strided_slice %67 {offsets = [0, 0], sizes = [2, 32], strides = [1, 1]} : vector<2x64xf32> to vector<2x32xf32>
    %70 = arith.addf %68, %69 : vector<2x32xf32>
    %71 = arith.negf %70 : vector<2x32xf32>
    %72 = math.exp %71 : vector<2x32xf32>
    %cst_22 = arith.constant 1.000000e+00 : f32
    %73 = vector.broadcast %cst_22 : f32 to vector<2x32xf32>
    %74 = arith.addf %73, %72 : vector<2x32xf32>
    %75 = arith.divf %73, %74 : vector<2x32xf32>
    %76 = vector.extract_strided_slice %66 {offsets = [0, 32], sizes = [2, 32], strides = [1, 1]} : vector<2x96xf32> to vector<2x32xf32>
    %77 = vector.extract_strided_slice %67 {offsets = [0, 32], sizes = [2, 32], strides = [1, 1]} : vector<2x64xf32> to vector<2x32xf32>
    %78 = arith.addf %76, %77 : vector<2x32xf32>
    %79 = arith.negf %78 : vector<2x32xf32>
    %80 = math.exp %79 : vector<2x32xf32>
    %cst_23 = arith.constant 1.000000e+00 : f32
    %81 = vector.broadcast %cst_23 : f32 to vector<2x32xf32>
    %82 = arith.addf %81, %80 : vector<2x32xf32>
    %83 = arith.divf %81, %82 : vector<2x32xf32>
    %cst_24 = arith.constant dense<0.000000e+00> : vector<2x32xf32>
    %84 = tpu.matmul %64, %4, %cst_24 {dimension_numbers = #tpu.dot_dimension_numbers<[1], [0], [0], [1], [0, 0, 1, 1], [], []>} : vector<2x32xf32>, vector<32x32xf32>, vector<2x32xf32> -> vector<2x32xf32>
    %85 = vector.extract_strided_slice %66 {offsets = [0, 64], sizes = [2, 32], strides = [1, 1]} : vector<2x96xf32> to vector<2x32xf32>
    %86 = vector.broadcast %5 : vector<1x32xf32> to vector<2x32xf32>
    %87 = arith.addf %84, %86 : vector<2x32xf32>
    %88 = arith.mulf %75, %87 : vector<2x32xf32>
    %89 = arith.addf %85, %88 : vector<2x32xf32>
    %90 = math.tanh %89 : vector<2x32xf32>
    %91 = arith.subf %64, %90 : vector<2x32xf32>
    %92 = arith.mulf %83, %91 : vector<2x32xf32>
    %93 = arith.addf %90, %92 : vector<2x32xf32>
    %c3 = arith.constant 3 : index
    %c0_25 = arith.constant 0 : index
    %c0_26 = arith.constant 0 : index
    %94 = vector.load %arg2[%c3, %c0_25, %c0_26] : memref<8x2x96xf32, #tpu.memory_space<vmem>>, vector<1x2x96xf32>
    %95 = vector.shape_cast %94 : vector<1x2x96xf32> to vector<2x96xf32>
    %cst_27 = arith.constant dense<0.000000e+00> : vector<2x64xf32>
    %96 = tpu.matmul %93, %3, %cst_27 {dimension_numbers = #tpu.dot_dimension_numbers<[1], [0], [0], [1], [0, 0, 1, 1], [], []>} : vector<2x32xf32>, vector<32x64xf32>, vector<2x64xf32> -> vector<2x64xf32>
    %97 = vector.extract_strided_slice %95 {offsets = [0, 0], sizes = [2, 32], strides = [1, 1]} : vector<2x96xf32> to vector<2x32xf32>
    %98 = vector.extract_strided_slice %96 {offsets = [0, 0], sizes = [2, 32], strides = [1, 1]} : vector<2x64xf32> to vector<2x32xf32>
    %99 = arith.addf %97, %98 : vector<2x32xf32>
    %100 = arith.negf %99 : vector<2x32xf32>
    %101 = math.exp %100 : vector<2x32xf32>
    %cst_28 = arith.constant 1.000000e+00 : f32
    %102 = vector.broadcast %cst_28 : f32 to vector<2x32xf32>
    %103 = arith.addf %102, %101 : vector<2x32xf32>
    %104 = arith.divf %102, %103 : vector<2x32xf32>
    %105 = vector.extract_strided_slice %95 {offsets = [0, 32], sizes = [2, 32], strides = [1, 1]} : vector<2x96xf32> to vector<2x32xf32>
    %106 = vector.extract_strided_slice %96 {offsets = [0, 32], sizes = [2, 32], strides = [1, 1]} : vector<2x64xf32> to vector<2x32xf32>
    %107 = arith.addf %105, %106 : vector<2x32xf32>
    %108 = arith.negf %107 : vector<2x32xf32>
    %109 = math.exp %108 : vector<2x32xf32>
    %cst_29 = arith.constant 1.000000e+00 : f32
    %110 = vector.broadcast %cst_29 : f32 to vector<2x32xf32>
    %111 = arith.addf %110, %109 : vector<2x32xf32>
    %112 = arith.divf %110, %111 : vector<2x32xf32>
    %cst_30 = arith.constant dense<0.000000e+00> : vector<2x32xf32>
    %113 = tpu.matmul %93, %4, %cst_30 {dimension_numbers = #tpu.dot_dimension_numbers<[1], [0], [0], [1], [0, 0, 1, 1], [], []>} : vector<2x32xf32>, vector<32x32xf32>, vector<2x32xf32> -> vector<2x32xf32>
    %114 = vector.extract_strided_slice %95 {offsets = [0, 64], sizes = [2, 32], strides = [1, 1]} : vector<2x96xf32> to vector<2x32xf32>
    %115 = vector.broadcast %5 : vector<1x32xf32> to vector<2x32xf32>
    %116 = arith.addf %113, %115 : vector<2x32xf32>
    %117 = arith.mulf %104, %116 : vector<2x32xf32>
    %118 = arith.addf %114, %117 : vector<2x32xf32>
    %119 = math.tanh %118 : vector<2x32xf32>
    %120 = arith.subf %93, %119 : vector<2x32xf32>
    %121 = arith.mulf %112, %120 : vector<2x32xf32>
    %122 = arith.addf %119, %121 : vector<2x32xf32>
    %c4 = arith.constant 4 : index
    %c0_31 = arith.constant 0 : index
    %c0_32 = arith.constant 0 : index
    %123 = vector.load %arg2[%c4, %c0_31, %c0_32] : memref<8x2x96xf32, #tpu.memory_space<vmem>>, vector<1x2x96xf32>
    %124 = vector.shape_cast %123 : vector<1x2x96xf32> to vector<2x96xf32>
    %cst_33 = arith.constant dense<0.000000e+00> : vector<2x64xf32>
    %125 = tpu.matmul %122, %3, %cst_33 {dimension_numbers = #tpu.dot_dimension_numbers<[1], [0], [0], [1], [0, 0, 1, 1], [], []>} : vector<2x32xf32>, vector<32x64xf32>, vector<2x64xf32> -> vector<2x64xf32>
    %126 = vector.extract_strided_slice %124 {offsets = [0, 0], sizes = [2, 32], strides = [1, 1]} : vector<2x96xf32> to vector<2x32xf32>
    %127 = vector.extract_strided_slice %125 {offsets = [0, 0], sizes = [2, 32], strides = [1, 1]} : vector<2x64xf32> to vector<2x32xf32>
    %128 = arith.addf %126, %127 : vector<2x32xf32>
    %129 = arith.negf %128 : vector<2x32xf32>
    %130 = math.exp %129 : vector<2x32xf32>
    %cst_34 = arith.constant 1.000000e+00 : f32
    %131 = vector.broadcast %cst_34 : f32 to vector<2x32xf32>
    %132 = arith.addf %131, %130 : vector<2x32xf32>
    %133 = arith.divf %131, %132 : vector<2x32xf32>
    %134 = vector.extract_strided_slice %124 {offsets = [0, 32], sizes = [2, 32], strides = [1, 1]} : vector<2x96xf32> to vector<2x32xf32>
    %135 = vector.extract_strided_slice %125 {offsets = [0, 32], sizes = [2, 32], strides = [1, 1]} : vector<2x64xf32> to vector<2x32xf32>
    %136 = arith.addf %134, %135 : vector<2x32xf32>
    %137 = arith.negf %136 : vector<2x32xf32>
    %138 = math.exp %137 : vector<2x32xf32>
    %cst_35 = arith.constant 1.000000e+00 : f32
    %139 = vector.broadcast %cst_35 : f32 to vector<2x32xf32>
    %140 = arith.addf %139, %138 : vector<2x32xf32>
    %141 = arith.divf %139, %140 : vector<2x32xf32>
    %cst_36 = arith.constant dense<0.000000e+00> : vector<2x32xf32>
    %142 = tpu.matmul %122, %4, %cst_36 {dimension_numbers = #tpu.dot_dimension_numbers<[1], [0], [0], [1], [0, 0, 1, 1], [], []>} : vector<2x32xf32>, vector<32x32xf32>, vector<2x32xf32> -> vector<2x32xf32>
    %143 = vector.extract_strided_slice %124 {offsets = [0, 64], sizes = [2, 32], strides = [1, 1]} : vector<2x96xf32> to vector<2x32xf32>
    %144 = vector.broadcast %5 : vector<1x32xf32> to vector<2x32xf32>
    %145 = arith.addf %142, %144 : vector<2x32xf32>
    %146 = arith.mulf %133, %145 : vector<2x32xf32>
    %147 = arith.addf %143, %146 : vector<2x32xf32>
    %148 = math.tanh %147 : vector<2x32xf32>
    %149 = arith.subf %122, %148 : vector<2x32xf32>
    %150 = arith.mulf %141, %149 : vector<2x32xf32>
    %151 = arith.addf %148, %150 : vector<2x32xf32>
    %c5 = arith.constant 5 : index
    %c0_37 = arith.constant 0 : index
    %c0_38 = arith.constant 0 : index
    %152 = vector.load %arg2[%c5, %c0_37, %c0_38] : memref<8x2x96xf32, #tpu.memory_space<vmem>>, vector<1x2x96xf32>
    %153 = vector.shape_cast %152 : vector<1x2x96xf32> to vector<2x96xf32>
    %cst_39 = arith.constant dense<0.000000e+00> : vector<2x64xf32>
    %154 = tpu.matmul %151, %3, %cst_39 {dimension_numbers = #tpu.dot_dimension_numbers<[1], [0], [0], [1], [0, 0, 1, 1], [], []>} : vector<2x32xf32>, vector<32x64xf32>, vector<2x64xf32> -> vector<2x64xf32>
    %155 = vector.extract_strided_slice %153 {offsets = [0, 0], sizes = [2, 32], strides = [1, 1]} : vector<2x96xf32> to vector<2x32xf32>
    %156 = vector.extract_strided_slice %154 {offsets = [0, 0], sizes = [2, 32], strides = [1, 1]} : vector<2x64xf32> to vector<2x32xf32>
    %157 = arith.addf %155, %156 : vector<2x32xf32>
    %158 = arith.negf %157 : vector<2x32xf32>
    %159 = math.exp %158 : vector<2x32xf32>
    %cst_40 = arith.constant 1.000000e+00 : f32
    %160 = vector.broadcast %cst_40 : f32 to vector<2x32xf32>
    %161 = arith.addf %160, %159 : vector<2x32xf32>
    %162 = arith.divf %160, %161 : vector<2x32xf32>
    %163 = vector.extract_strided_slice %153 {offsets = [0, 32], sizes = [2, 32], strides = [1, 1]} : vector<2x96xf32> to vector<2x32xf32>
    %164 = vector.extract_strided_slice %154 {offsets = [0, 32], sizes = [2, 32], strides = [1, 1]} : vector<2x64xf32> to vector<2x32xf32>
    %165 = arith.addf %163, %164 : vector<2x32xf32>
    %166 = arith.negf %165 : vector<2x32xf32>
    %167 = math.exp %166 : vector<2x32xf32>
    %cst_41 = arith.constant 1.000000e+00 : f32
    %168 = vector.broadcast %cst_41 : f32 to vector<2x32xf32>
    %169 = arith.addf %168, %167 : vector<2x32xf32>
    %170 = arith.divf %168, %169 : vector<2x32xf32>
    %cst_42 = arith.constant dense<0.000000e+00> : vector<2x32xf32>
    %171 = tpu.matmul %151, %4, %cst_42 {dimension_numbers = #tpu.dot_dimension_numbers<[1], [0], [0], [1], [0, 0, 1, 1], [], []>} : vector<2x32xf32>, vector<32x32xf32>, vector<2x32xf32> -> vector<2x32xf32>
    %172 = vector.extract_strided_slice %153 {offsets = [0, 64], sizes = [2, 32], strides = [1, 1]} : vector<2x96xf32> to vector<2x32xf32>
    %173 = vector.broadcast %5 : vector<1x32xf32> to vector<2x32xf32>
    %174 = arith.addf %171, %173 : vector<2x32xf32>
    %175 = arith.mulf %162, %174 : vector<2x32xf32>
    %176 = arith.addf %172, %175 : vector<2x32xf32>
    %177 = math.tanh %176 : vector<2x32xf32>
    %178 = arith.subf %151, %177 : vector<2x32xf32>
    %179 = arith.mulf %170, %178 : vector<2x32xf32>
    %180 = arith.addf %177, %179 : vector<2x32xf32>
    %c6 = arith.constant 6 : index
    %c0_43 = arith.constant 0 : index
    %c0_44 = arith.constant 0 : index
    %181 = vector.load %arg2[%c6, %c0_43, %c0_44] : memref<8x2x96xf32, #tpu.memory_space<vmem>>, vector<1x2x96xf32>
    %182 = vector.shape_cast %181 : vector<1x2x96xf32> to vector<2x96xf32>
    %cst_45 = arith.constant dense<0.000000e+00> : vector<2x64xf32>
    %183 = tpu.matmul %180, %3, %cst_45 {dimension_numbers = #tpu.dot_dimension_numbers<[1], [0], [0], [1], [0, 0, 1, 1], [], []>} : vector<2x32xf32>, vector<32x64xf32>, vector<2x64xf32> -> vector<2x64xf32>
    %184 = vector.extract_strided_slice %182 {offsets = [0, 0], sizes = [2, 32], strides = [1, 1]} : vector<2x96xf32> to vector<2x32xf32>
    %185 = vector.extract_strided_slice %183 {offsets = [0, 0], sizes = [2, 32], strides = [1, 1]} : vector<2x64xf32> to vector<2x32xf32>
    %186 = arith.addf %184, %185 : vector<2x32xf32>
    %187 = arith.negf %186 : vector<2x32xf32>
    %188 = math.exp %187 : vector<2x32xf32>
    %cst_46 = arith.constant 1.000000e+00 : f32
    %189 = vector.broadcast %cst_46 : f32 to vector<2x32xf32>
    %190 = arith.addf %189, %188 : vector<2x32xf32>
    %191 = arith.divf %189, %190 : vector<2x32xf32>
    %192 = vector.extract_strided_slice %182 {offsets = [0, 32], sizes = [2, 32], strides = [1, 1]} : vector<2x96xf32> to vector<2x32xf32>
    %193 = vector.extract_strided_slice %183 {offsets = [0, 32], sizes = [2, 32], strides = [1, 1]} : vector<2x64xf32> to vector<2x32xf32>
    %194 = arith.addf %192, %193 : vector<2x32xf32>
    %195 = arith.negf %194 : vector<2x32xf32>
    %196 = math.exp %195 : vector<2x32xf32>
    %cst_47 = arith.constant 1.000000e+00 : f32
    %197 = vector.broadcast %cst_47 : f32 to vector<2x32xf32>
    %198 = arith.addf %197, %196 : vector<2x32xf32>
    %199 = arith.divf %197, %198 : vector<2x32xf32>
    %cst_48 = arith.constant dense<0.000000e+00> : vector<2x32xf32>
    %200 = tpu.matmul %180, %4, %cst_48 {dimension_numbers = #tpu.dot_dimension_numbers<[1], [0], [0], [1], [0, 0, 1, 1], [], []>} : vector<2x32xf32>, vector<32x32xf32>, vector<2x32xf32> -> vector<2x32xf32>
    %201 = vector.extract_strided_slice %182 {offsets = [0, 64], sizes = [2, 32], strides = [1, 1]} : vector<2x96xf32> to vector<2x32xf32>
    %202 = vector.broadcast %5 : vector<1x32xf32> to vector<2x32xf32>
    %203 = arith.addf %200, %202 : vector<2x32xf32>
    %204 = arith.mulf %191, %203 : vector<2x32xf32>
    %205 = arith.addf %201, %204 : vector<2x32xf32>
    %206 = math.tanh %205 : vector<2x32xf32>
    %207 = arith.subf %180, %206 : vector<2x32xf32>
    %208 = arith.mulf %199, %207 : vector<2x32xf32>
    %209 = arith.addf %206, %208 : vector<2x32xf32>
    %c7 = arith.constant 7 : index
    %c0_49 = arith.constant 0 : index
    %c0_50 = arith.constant 0 : index
    %210 = vector.load %arg2[%c7, %c0_49, %c0_50] : memref<8x2x96xf32, #tpu.memory_space<vmem>>, vector<1x2x96xf32>
    %211 = vector.shape_cast %210 : vector<1x2x96xf32> to vector<2x96xf32>
    %cst_51 = arith.constant dense<0.000000e+00> : vector<2x64xf32>
    %212 = tpu.matmul %209, %3, %cst_51 {dimension_numbers = #tpu.dot_dimension_numbers<[1], [0], [0], [1], [0, 0, 1, 1], [], []>} : vector<2x32xf32>, vector<32x64xf32>, vector<2x64xf32> -> vector<2x64xf32>
    %213 = vector.extract_strided_slice %211 {offsets = [0, 0], sizes = [2, 32], strides = [1, 1]} : vector<2x96xf32> to vector<2x32xf32>
    %214 = vector.extract_strided_slice %212 {offsets = [0, 0], sizes = [2, 32], strides = [1, 1]} : vector<2x64xf32> to vector<2x32xf32>
    %215 = arith.addf %213, %214 : vector<2x32xf32>
    %216 = arith.negf %215 : vector<2x32xf32>
    %217 = math.exp %216 : vector<2x32xf32>
    %cst_52 = arith.constant 1.000000e+00 : f32
    %218 = vector.broadcast %cst_52 : f32 to vector<2x32xf32>
    %219 = arith.addf %218, %217 : vector<2x32xf32>
    %220 = arith.divf %218, %219 : vector<2x32xf32>
    %221 = vector.extract_strided_slice %211 {offsets = [0, 32], sizes = [2, 32], strides = [1, 1]} : vector<2x96xf32> to vector<2x32xf32>
    %222 = vector.extract_strided_slice %212 {offsets = [0, 32], sizes = [2, 32], strides = [1, 1]} : vector<2x64xf32> to vector<2x32xf32>
    %223 = arith.addf %221, %222 : vector<2x32xf32>
    %224 = arith.negf %223 : vector<2x32xf32>
    %225 = math.exp %224 : vector<2x32xf32>
    %cst_53 = arith.constant 1.000000e+00 : f32
    %226 = vector.broadcast %cst_53 : f32 to vector<2x32xf32>
    %227 = arith.addf %226, %225 : vector<2x32xf32>
    %228 = arith.divf %226, %227 : vector<2x32xf32>
    %cst_54 = arith.constant dense<0.000000e+00> : vector<2x32xf32>
    %229 = tpu.matmul %209, %4, %cst_54 {dimension_numbers = #tpu.dot_dimension_numbers<[1], [0], [0], [1], [0, 0, 1, 1], [], []>} : vector<2x32xf32>, vector<32x32xf32>, vector<2x32xf32> -> vector<2x32xf32>
    %230 = vector.extract_strided_slice %211 {offsets = [0, 64], sizes = [2, 32], strides = [1, 1]} : vector<2x96xf32> to vector<2x32xf32>
    %231 = vector.broadcast %5 : vector<1x32xf32> to vector<2x32xf32>
    %232 = arith.addf %229, %231 : vector<2x32xf32>
    %233 = arith.mulf %220, %232 : vector<2x32xf32>
    %234 = arith.addf %230, %233 : vector<2x32xf32>
    %235 = math.tanh %234 : vector<2x32xf32>
    %236 = arith.subf %209, %235 : vector<2x32xf32>
    %237 = arith.mulf %228, %236 : vector<2x32xf32>
    %238 = arith.addf %235, %237 : vector<2x32xf32>
    %239 = tpu.concatenate %35, %64, %93, %122, %151, %180, %209, %238 in 1 : vector<2x32xf32>, vector<2x32xf32>, vector<2x32xf32>, vector<2x32xf32>, vector<2x32xf32>, vector<2x32xf32>, vector<2x32xf32>, vector<2x32xf32> -> vector<2x256xf32>
    %c0_55 = arith.constant 0 : index
    %c0_56 = arith.constant 0 : index
    %c0_57 = arith.constant 0 : index
    %240 = vector.load %arg5[%c0_55, %c0_56, %c0_57] : memref<1x2x256xf32, #tpu.memory_space<vmem>>, vector<1x2x256xf32>
    %241 = vector.shape_cast %240 : vector<1x2x256xf32> to vector<2x256xf32>
    %242 = vector.shape_cast %239 : vector<2x256xf32> to vector<1x2x256xf32>
    tpu.vector_store %arg5[%c0_55, %c0_56, %c0_57], %242 {strides = array<i32>} : memref<1x2x256xf32, #tpu.memory_space<vmem>>, vector<1x2x256xf32>,
    %c0_58 = arith.constant 0 : index
    %c0_59 = arith.constant 0 : index
    %243 = vector.load %arg6[%c0_58, %c0_59] : memref<2x32xf32, #tpu.memory_space<vmem>>, vector<2x32xf32>
    tpu.vector_store %arg6[%c0_58, %c0_59], %238 {strides = array<i32>} : memref<2x32xf32, #tpu.memory_space<vmem>>, vector<2x32xf32>,
    return
  }
  func.func @transform_0(%arg0: i32, %arg1: i32) -> (i32, i32, i32) {
    %c0_i32 = arith.constant 0 : i32
    %c0_i32_0 = arith.constant 0 : i32
    return %arg1, %arg0, %c0_i32 : i32, i32, i32
  }
  func.func @transform_1(%arg0: i32, %arg1: i32) -> (i32, i32) {
    %c0_i32 = arith.constant 0 : i32
    %c0_i32_0 = arith.constant 0 : i32
    %c0_i32_1 = arith.constant 0 : i32
    return %c0_i32, %c0_i32_0 : i32, i32
  }
  func.func @transform_2(%arg0: i32, %arg1: i32) -> (i32, i32) {
    %c0_i32 = arith.constant 0 : i32
    %c0_i32_0 = arith.constant 0 : i32
    %c0_i32_1 = arith.constant 0 : i32
    return %c0_i32, %c0_i32_0 : i32, i32
  }
  func.func @transform_3(%arg0: i32, %arg1: i32) -> (i32, i32, i32) {
    %c0_i32 = arith.constant 0 : i32
    %c0_i32_0 = arith.constant 0 : i32
    return %arg1, %arg0, %c0_i32 : i32, i32, i32
  }
}

</mosaic_0001>

<llo_original>
// kernel: _lambda_.1
$region0: #{_lambda_.1}
  #allocation0 [shape = 'u32[]', space=smem, size = 0x4, offset = 0x4, fixed_abs, tag = 'smem constant byte address 0x4 - core index']
  #allocation1 [shape = 'u32[72,128]{1,0:T(1,128)}', space=vmem, size = 0x9000, scoped, tag = 'internal scratch']
  #allocation2 [shape = 'f32[2,32]{1,0:T(2,128)}', space=vmem, size = 0x400, scoped, tag = 'scratch operand']
  %s0 = inlined_call_operand.vmem [shape: f32[8,2,96], index: 0, kind: input, shape index: {}]
  %s1 = inlined_call_operand.vmem [shape: f32[32,96], index: 1, kind: input, shape index: {}]
  %s2 = inlined_call_operand.vmem [shape: f32[1,32], index: 2, kind: input, shape index: {}]
  %s3 = inlined_call_operand.vmem [shape: f32[1,2,256], index: 3, kind: output, shape index: {}]
  %s4 = sld [smem:[#allocation0]]
  $region26: #{_lambda_.1} parent=0
    _
  %s6 = ssub.s32 1, %s4
  %s7 = scalar_select 0, %s6, %s4
  // Predicated region
  $region2: #{_lambda_.1} parent=0 // pred_check
    _
  $region3: #{_lambda_.1} parent=0 // pred_check_branch
    %9 = sbr.rel (0) target = $region5
  $region4: #{_lambda_.1} parent=0 // pred_region
    _
  $region5: #{_lambda_.1} parent=0 // pred_fallthru
    _
  // Predicated region
  $region6: #{_lambda_.1} parent=0 // pred_check
    _
  $region7: #{_lambda_.1} parent=0 // pred_check_branch
    %11 = sbr.rel (0) target = $region9
  $region8: #{_lambda_.1} parent=0 // pred_region
    _
  $region9: #{_lambda_.1} parent=0 // pred_fallthru
    _
  // Predicated region
  $region10: #{_lambda_.1} parent=0 // pred_check
    _
  $region11: #{_lambda_.1} parent=0 // pred_check_branch
    %13 = sbr.rel (0) target = $region13
  $region12: #{_lambda_.1} parent=0 // pred_region
    _
  $region13: #{_lambda_.1} parent=0 // pred_fallthru
    _
  %p14 = scmp.eq.s32.totalorder 0, 0
  // Predicated region
  $region14: #{_lambda_.1} parent=0 // pred_check
    %p15 = pneg %p14
  $region15: #{_lambda_.1} parent=0 // pred_check_branch
    %17 = sbr.rel (%p15) target = $region17
  $region16: #{_lambda_.1} parent=0 // pred_region
    %vm18 = vcmask 254976
    %19 = vst.msk [vmem:[#allocation2] sm:$0x3] %vm18, 0.0
  $region17: #{_lambda_.1} parent=0 // pred_fallthru
    _
  %v20 = vld [vmem:[%s1] sm:$0xff]
  %v21 = vld [vmem:[%s1 + $0x8] sm:$0xff]
  %v22 = vld [vmem:[%s1 + $0x10] sm:$0xff]
  %v23 = vld [vmem:[%s1 + $0x18] sm:$0xff]
  %v24 = vld [vmem:[%s2] sm:$0x1]
  %v25 = vld [vmem:[#allocation2] sm:$0x3]
  %v26 = vld [vmem:[%s0] sm:$0x3]
  %vm27 = vcmask 261120
  %v29 = vsel %vm27, %v25, 0
  %31 = vmatpush.msra.mxu0 0.0
  %32 = vmatpush.msra.mxu0 0.0
  %33 = vmatpush.msra.mxu0 0.0
  %34 = vmatpush.msra.mxu0 0.0
  %35 = vmatpush.msra.mxu0 0.0
  %36 = vmatpush.msra.mxu0 0.0
  %37 = vmatpush.msra.mxu0 0.0
  %38 = vmatpush.msra.mxu0 0.0
  %39 = vmatpush.msra.mxu0 0.0
  %40 = vmatpush.msra.mxu0 0.0
  %41 = vmatpush.msra.mxu0 0.0
  %42 = vmatpush.msra.mxu0 0.0
  %43 = vmatpush.msra.mxu0 %v23
  %44 = vmatpush.msra.mxu0 %v22
  %45 = vmatpush.msra.mxu0 %v21
  %46 = vmatpush.msra.mxu0 %v20
  %47 = vmatmul.f32.gmra.mxu0 %v29
  %v48 = vpop.f32.mrf.mxu0
  %v49 = vadd.f32 0.0, %v48
  %50 = vdwg.mxu0
  %v51 = vadd.f32 %v26, %v49
  %v52 = vxor.u32 %v51, 2147483648
  %v53 = vmul.f32 %v52, 1.442695
  %v54 = vpow.pop %v53
  %v55 = vadd.f32 %v54, 1.0
  %v56 = vrcp.pop %v55
  %v57 = vmul.f32 %v55, %v56
  %v58 = vsub.f32 1.0, %v57
  %v59 = vmul.f32 %v56, %v58
  %v60 = vadd.f32 %v56, %v59
  %vm61 = vweird.f32 %v55
  %vm62 = vweird.f32 %v56
  %vm63 = vmor %vm61, %vm62
  %v64 = vsel %vm63, %v56, %v60
  %v65 = vand.u32 2147483647, %v55
  %vm66 = vcmp.eq.f32.partialorder %v65, 8.507059e+37
  %v67 = vand.u32 %v55, 2147483648
  %v68 = vor.u32 1.1754944e-38, %v67
  %v69 = vsel %vm66, %v68, %v64
  %v70 = vmul.f32 1.0, %v69
  %v72 = vperm.slane %v24, 0
  %78 = vrot.lane.b32.xlu0 %v20, 64
  %v79 = vpop.permute.xlu0 %78
  %80 = vrot.lane.b32.xlu0 %v21, 64
  %v81 = vpop.permute.xlu0 %80
  %82 = vrot.lane.b32.xlu0 %v22, 64
  %v83 = vpop.permute.xlu0 %82
  %84 = vrot.lane.b32.xlu0 %v23, 64
  %v85 = vpop.permute.xlu0 %84
  %90 = vmatpush.msra.mxu0 0.0
  %91 = vmatpush.msra.mxu0 0.0
  %92 = vmatpush.msra.mxu0 0.0
  %93 = vmatpush.msra.mxu0 0.0
  %94 = vmatpush.msra.mxu0 0.0
  %95 = vmatpush.msra.mxu0 0.0
  %96 = vmatpush.msra.mxu0 0.0
  %97 = vmatpush.msra.mxu0 0.0
  %98 = vmatpush.msra.mxu0 0.0
  %99 = vmatpush.msra.mxu0 0.0
  %100 = vmatpush.msra.mxu0 0.0
  %101 = vmatpush.msra.mxu0 0.0
  %102 = vmatpush.msra.mxu0 %v85
  %103 = vmatpush.msra.mxu0 %v83
  %104 = vmatpush.msra.mxu0 %v81
  %105 = vmatpush.msra.mxu0 %v79
  %106 = vmatmul.f32.gmra.mxu0 %v29
  %v107 = vpop.f32.mrf.mxu0
  %v108 = vadd.f32 %v72, %v107
  %109 = vdwg.mxu0
  %v110 = vmul.f32 %v70, %v108
  %112 = vrot.lane.b32.xlu0 %v110, 64
  %v113 = vpop.permute.xlu0 %112
  %v115 = vadd.f32 %v26, %v113
  %v116 = vtanh.pop %v115
  %118 = vrot.lane.b32.xlu0 %v116, 64
  %v119 = vpop.permute.xlu0 %118
  %v121 = vsub.f32 %v25, %v119
  %123 = vrot.lane.b32.xlu0 %v121, 32
  %v124 = vpop.permute.xlu0 %123
  %v126 = vmul.f32 %v70, %v124
  %128 = vrot.lane.b32.xlu0 %v126, 32
  %v129 = vpop.permute.xlu0 %128
  %v131 = vadd.f32 %v116, %v129
  %s132 = scalar_lea.vmem %s0, 2
  %v133 = vld [vmem:[%s132] sm:$0x3]
  %135 = vrot.lane.b32.xlu0 %v131, 64
  %v136 = vpop.permute.xlu0 %135
  %v137 = vsel %vm27, %v136, 0
  %139 = vmatpush.msra.mxu0 0.0
  %140 = vmatpush.msra.mxu0 0.0
  %141 = vmatpush.msra.mxu0 0.0
  %142 = vmatpush.msra.mxu0 0.0
  %143 = vmatpush.msra.mxu0 0.0
  %144 = vmatpush.msra.mxu0 0.0
  %145 = vmatpush.msra.mxu0 0.0
  %146 = vmatpush.msra.mxu0 0.0
  %147 = vmatpush.msra.mxu0 0.0
  %148 = vmatpush.msra.mxu0 0.0
  %149 = vmatpush.msra.mxu0 0.0
  %150 = vmatpush.msra.mxu0 0.0
  %151 = vmatpush.msra.mxu0 %v23
  %152 = vmatpush.msra.mxu0 %v22
  %153 = vmatpush.msra.mxu0 %v21
  %154 = vmatpush.msra.mxu0 %v20
  %155 = vmatmul.f32.gmra.mxu0 %v137
  %v156 = vpop.f32.mrf.mxu0
  %v157 = vadd.f32 0.0, %v156
  %158 = vdwg.mxu0
  %v159 = vadd.f32 %v133, %v157
  %v160 = vxor.u32 %v159, 2147483648
  %v161 = vmul.f32 %v160, 1.442695
  %v162 = vpow.pop %v161
  %v163 = vadd.f32 %v162, 1.0
  %v164 = vrcp.pop %v163
  %v165 = vmul.f32 %v163, %v164
  %v166 = vsub.f32 1.0, %v165
  %v167 = vmul.f32 %v164, %v166
  %v168 = vadd.f32 %v164, %v167
  %vm169 = vweird.f32 %v163
  %vm170 = vweird.f32 %v164
  %vm171 = vmor %vm169, %vm170
  %v172 = vsel %vm171, %v164, %v168
  %v173 = vand.u32 2147483647, %v163
  %vm174 = vcmp.eq.f32.partialorder %v173, 8.507059e+37
  %v175 = vand.u32 %v163, 2147483648
  %v176 = vor.u32 1.1754944e-38, %v175
  %v177 = vsel %vm174, %v176, %v172
  %v178 = vmul.f32 1.0, %v177
  %179 = vmatpush.msra.mxu0 0.0
  %180 = vmatpush.msra.mxu0 0.0
  %181 = vmatpush.msra.mxu0 0.0
  %182 = vmatpush.msra.mxu0 0.0
  %183 = vmatpush.msra.mxu0 0.0
  %184 = vmatpush.msra.mxu0 0.0
  %185 = vmatpush.msra.mxu0 0.0
  %186 = vmatpush.msra.mxu0 0.0
  %187 = vmatpush.msra.mxu0 0.0
  %188 = vmatpush.msra.mxu0 0.0
  %189 = vmatpush.msra.mxu0 0.0
  %190 = vmatpush.msra.mxu0 0.0
  %191 = vmatpush.msra.mxu0 %v85
  %192 = vmatpush.msra.mxu0 %v83
  %193 = vmatpush.msra.mxu0 %v81
  %194 = vmatpush.msra.mxu0 %v79
  %195 = vmatmul.f32.gmra.mxu0 %v137
  %v196 = vpop.f32.mrf.mxu0
  %v197 = vadd.f32 %v72, %v196
  %198 = vdwg.mxu0
  %v199 = vmul.f32 %v178, %v197
  %201 = vrot.lane.b32.xlu0 %v199, 64
  %v202 = vpop.permute.xlu0 %201
  %v204 = vadd.f32 %v133, %v202
  %v205 = vtanh.pop %v204
  %v206 = vsub.f32 %v131, %v205
  %208 = vrot.lane.b32.xlu0 %v206, 96
  %v209 = vpop.permute.xlu0 %208
  %v211 = vmul.f32 %v178, %v209
  %213 = vrot.lane.b32.xlu0 %v211, 32
  %v214 = vpop.permute.xlu0 %213
  %v216 = vadd.f32 %v205, %v214
  %s217 = scalar_lea.vmem %s0, 4
  %v218 = vld [vmem:[%s217] sm:$0x3]
  %220 = vrot.lane.b32.xlu0 %v216, 64
  %v221 = vpop.permute.xlu0 %220
  %v222 = vsel %vm27, %v221, 0
  %224 = vmatpush.msra.mxu0 0.0
  %225 = vmatpush.msra.mxu0 0.0
  %226 = vmatpush.msra.mxu0 0.0
  %227 = vmatpush.msra.mxu0 0.0
  %228 = vmatpush.msra.mxu0 0.0
  %229 = vmatpush.msra.mxu0 0.0
  %230 = vmatpush.msra.mxu0 0.0
  %231 = vmatpush.msra.mxu0 0.0
  %232 = vmatpush.msra.mxu0 0.0
  %233 = vmatpush.msra.mxu0 0.0
  %234 = vmatpush.msra.mxu0 0.0
  %235 = vmatpush.msra.mxu0 0.0
  %236 = vmatpush.msra.mxu0 %v23
  %237 = vmatpush.msra.mxu0 %v22
  %238 = vmatpush.msra.mxu0 %v21
  %239 = vmatpush.msra.mxu0 %v20
  %240 = vmatmul.f32.gmra.mxu0 %v222
  %v241 = vpop.f32.mrf.mxu0
  %v242 = vadd.f32 0.0, %v241
  %243 = vdwg.mxu0
  %v244 = vadd.f32 %v218, %v242
  %v245 = vxor.u32 %v244, 2147483648
  %v246 = vmul.f32 %v245, 1.442695
  %v247 = vpow.pop %v246
  %v248 = vadd.f32 %v247, 1.0
  %v249 = vrcp.pop %v248
  %v250 = vmul.f32 %v248, %v249
  %v251 = vsub.f32 1.0, %v250
  %v252 = vmul.f32 %v249, %v251
  %v253 = vadd.f32 %v249, %v252
  %vm254 = vweird.f32 %v248
  %vm255 = vweird.f32 %v249
  %vm256 = vmor %vm254, %vm255
  %v257 = vsel %vm256, %v249, %v253
  %v258 = vand.u32 2147483647, %v248
  %vm259 = vcmp.eq.f32.partialorder %v258, 8.507059e+37
  %v260 = vand.u32 %v248, 2147483648
  %v261 = vor.u32 1.1754944e-38, %v260
  %v262 = vsel %vm259, %v261, %v257
  %v263 = vmul.f32 1.0, %v262
  %264 = vmatpush.msra.mxu0 0.0
  %265 = vmatpush.msra.mxu0 0.0
  %266 = vmatpush.msra.mxu0 0.0
  %267 = vmatpush.msra.mxu0 0.0
  %268 = vmatpush.msra.mxu0 0.0
  %269 = vmatpush.msra.mxu0 0.0
  %270 = vmatpush.msra.mxu0 0.0
  %271 = vmatpush.msra.mxu0 0.0
  %272 = vmatpush.msra.mxu0 0.0
  %273 = vmatpush.msra.mxu0 0.0
  %274 = vmatpush.msra.mxu0 0.0
  %275 = vmatpush.msra.mxu0 0.0
  %276 = vmatpush.msra.mxu0 %v85
  %277 = vmatpush.msra.mxu0 %v83
  %278 = vmatpush.msra.mxu0 %v81
  %279 = vmatpush.msra.mxu0 %v79
  %280 = vmatmul.f32.gmra.mxu0 %v222
  %v281 = vpop.f32.mrf.mxu0
  %v282 = vadd.f32 %v72, %v281
  %283 = vdwg.mxu0
  %v284 = vmul.f32 %v263, %v282
  %286 = vrot.lane.b32.xlu0 %v284, 64
  %v287 = vpop.permute.xlu0 %286
  %v289 = vadd.f32 %v218, %v287
  %v290 = vtanh.pop %v289
  %v291 = vsub.f32 %v216, %v290
  %293 = vrot.lane.b32.xlu0 %v291, 96
  %v294 = vpop.permute.xlu0 %293
  %v296 = vmul.f32 %v263, %v294
  %298 = vrot.lane.b32.xlu0 %v296, 32
  %v299 = vpop.permute.xlu0 %298
  %v301 = vadd.f32 %v290, %v299
  %s302 = scalar_lea.vmem %s0, 6
  %v303 = vld [vmem:[%s302] sm:$0x3]
  %305 = vrot.lane.b32.xlu0 %v301, 64
  %v306 = vpop.permute.xlu0 %305
  %v307 = vsel %vm27, %v306, 0
  %309 = vmatpush.msra.mxu0 0.0
  %310 = vmatpush.msra.mxu0 0.0
  %311 = vmatpush.msra.mxu0 0.0
  %312 = vmatpush.msra.mxu0 0.0
  %313 = vmatpush.msra.mxu0 0.0
  %314 = vmatpush.msra.mxu0 0.0
  %315 = vmatpush.msra.mxu0 0.0
  %316 = vmatpush.msra.mxu0 0.0
  %317 = vmatpush.msra.mxu0 0.0
  %318 = vmatpush.msra.mxu0 0.0
  %319 = vmatpush.msra.mxu0 0.0
  %320 = vmatpush.msra.mxu0 0.0
  %321 = vmatpush.msra.mxu0 %v23
  %322 = vmatpush.msra.mxu0 %v22
  %323 = vmatpush.msra.mxu0 %v21
  %324 = vmatpush.msra.mxu0 %v20
  %325 = vmatmul.f32.gmra.mxu0 %v307
  %v326 = vpop.f32.mrf.mxu0
  %v327 = vadd.f32 0.0, %v326
  %328 = vdwg.mxu0
  %v329 = vadd.f32 %v303, %v327
  %v330 = vxor.u32 %v329, 2147483648
  %v331 = vmul.f32 %v330, 1.442695
  %v332 = vpow.pop %v331
  %v333 = vadd.f32 %v332, 1.0
  %v334 = vrcp.pop %v333
  %v335 = vmul.f32 %v333, %v334
  %v336 = vsub.f32 1.0, %v335
  %v337 = vmul.f32 %v334, %v336
  %v338 = vadd.f32 %v334, %v337
  %vm339 = vweird.f32 %v333
  %vm340 = vweird.f32 %v334
  %vm341 = vmor %vm339, %vm340
  %v342 = vsel %vm341, %v334, %v338
  %v343 = vand.u32 2147483647, %v333
  %vm344 = vcmp.eq.f32.partialorder %v343, 8.507059e+37
  %v345 = vand.u32 %v333, 2147483648
  %v346 = vor.u32 1.1754944e-38, %v345
  %v347 = vsel %vm344, %v346, %v342
  %v348 = vmul.f32 1.0, %v347
  %349 = vmatpush.msra.mxu0 0.0
  %350 = vmatpush.msra.mxu0 0.0
  %351 = vmatpush.msra.mxu0 0.0
  %352 = vmatpush.msra.mxu0 0.0
  %353 = vmatpush.msra.mxu0 0.0
  %354 = vmatpush.msra.mxu0 0.0
  %355 = vmatpush.msra.mxu0 0.0
  %356 = vmatpush.msra.mxu0 0.0
  %357 = vmatpush.msra.mxu0 0.0
  %358 = vmatpush.msra.mxu0 0.0
  %359 = vmatpush.msra.mxu0 0.0
  %360 = vmatpush.msra.mxu0 0.0
  %361 = vmatpush.msra.mxu0 %v85
  %362 = vmatpush.msra.mxu0 %v83
  %363 = vmatpush.msra.mxu0 %v81
  %364 = vmatpush.msra.mxu0 %v79
  %365 = vmatmul.f32.gmra.mxu0 %v307
  %v366 = vpop.f32.mrf.mxu0
  %v367 = vadd.f32 %v72, %v366
  %368 = vdwg.mxu0
  %v369 = vmul.f32 %v348, %v367
  %371 = vrot.lane.b32.xlu0 %v369, 64
  %v372 = vpop.permute.xlu0 %371
  %v374 = vadd.f32 %v303, %v372
  %v375 = vtanh.pop %v374
  %v376 = vsub.f32 %v301, %v375
  %378 = vrot.lane.b32.xlu0 %v376, 96
  %v379 = vpop.permute.xlu0 %378
  %v381 = vmul.f32 %v348, %v379
  %383 = vrot.lane.b32.xlu0 %v381, 32
  %v384 = vpop.permute.xlu0 %383
  %v386 = vadd.f32 %v375, %v384
  %s387 = scalar_lea.vmem %s0, 8
  %v388 = vld [vmem:[%s387] sm:$0x3]
  %390 = vrot.lane.b32.xlu0 %v386, 64
  %v391 = vpop.permute.xlu0 %390
  %v392 = vsel %vm27, %v391, 0
  %394 = vmatpush.msra.mxu0 0.0
  %395 = vmatpush.msra.mxu0 0.0
  %396 = vmatpush.msra.mxu0 0.0
  %397 = vmatpush.msra.mxu0 0.0
  %398 = vmatpush.msra.mxu0 0.0
  %399 = vmatpush.msra.mxu0 0.0
  %400 = vmatpush.msra.mxu0 0.0
  %401 = vmatpush.msra.mxu0 0.0
  %402 = vmatpush.msra.mxu0 0.0
  %403 = vmatpush.msra.mxu0 0.0
  %404 = vmatpush.msra.mxu0 0.0
  %405 = vmatpush.msra.mxu0 0.0
  %406 = vmatpush.msra.mxu0 %v23
  %407 = vmatpush.msra.mxu0 %v22
  %408 = vmatpush.msra.mxu0 %v21
  %409 = vmatpush.msra.mxu0 %v20
  %410 = vmatmul.f32.gmra.mxu0 %v392
  %v411 = vpop.f32.mrf.mxu0
  %v412 = vadd.f32 0.0, %v411
  %413 = vdwg.mxu0
  %v414 = vadd.f32 %v388, %v412
  %v415 = vxor.u32 %v414, 2147483648
  %v416 = vmul.f32 %v415, 1.442695
  %v417 = vpow.pop %v416
  %v418 = vadd.f32 %v417, 1.0
  %v419 = vrcp.pop %v418
  %v420 = vmul.f32 %v418, %v419
  %v421 = vsub.f32 1.0, %v420
  %v422 = vmul.f32 %v419, %v421
  %v423 = vadd.f32 %v419, %v422
  %vm424 = vweird.f32 %v418
  %vm425 = vweird.f32 %v419
  %vm426 = vmor %vm424, %vm425
  %v427 = vsel %vm426, %v419, %v423
  %v428 = vand.u32 2147483647, %v418
  %vm429 = vcmp.eq.f32.partialorder %v428, 8.507059e+37
  %v430 = vand.u32 %v418, 2147483648
  %v431 = vor.u32 1.1754944e-38, %v430
  %v432 = vsel %vm429, %v431, %v427
  %v433 = vmul.f32 1.0, %v432
  %434 = vmatpush.msra.mxu0 0.0
  %435 = vmatpush.msra.mxu0 0.0
  %436 = vmatpush.msra.mxu0 0.0
  %437 = vmatpush.msra.mxu0 0.0
  %438 = vmatpush.msra.mxu0 0.0
  %439 = vmatpush.msra.mxu0 0.0
  %440 = vmatpush.msra.mxu0 0.0
  %441 = vmatpush.msra.mxu0 0.0
  %442 = vmatpush.msra.mxu0 0.0
  %443 = vmatpush.msra.mxu0 0.0
  %444 = vmatpush.msra.mxu0 0.0
  %445 = vmatpush.msra.mxu0 0.0
  %446 = vmatpush.msra.mxu0 %v85
  %447 = vmatpush.msra.mxu0 %v83
  %448 = vmatpush.msra.mxu0 %v81
  %449 = vmatpush.msra.mxu0 %v79
  %450 = vmatmul.f32.gmra.mxu0 %v392
  %v451 = vpop.f32.mrf.mxu0
  %v452 = vadd.f32 %v72, %v451
  %453 = vdwg.mxu0
  %v454 = vmul.f32 %v433, %v452
  %456 = vrot.lane.b32.xlu0 %v454, 64
  %v457 = vpop.permute.xlu0 %456
  %v459 = vadd.f32 %v388, %v457
  %v460 = vtanh.pop %v459
  %v461 = vsub.f32 %v386, %v460
  %463 = vrot.lane.b32.xlu0 %v461, 96
  %v464 = vpop.permute.xlu0 %463
  %v466 = vmul.f32 %v433, %v464
  %468 = vrot.lane.b32.xlu0 %v466, 32
  %v469 = vpop.permute.xlu0 %468
  %v471 = vadd.f32 %v460, %v469
  %s472 = scalar_lea.vmem %s0, 10
  %v473 = vld [vmem:[%s472] sm:$0x3]
  %475 = vrot.lane.b32.xlu0 %v471, 64
  %v476 = vpop.permute.xlu0 %475
  %v477 = vsel %vm27, %v476, 0
  %479 = vmatpush.msra.mxu0 0.0
  %480 = vmatpush.msra.mxu0 0.0
  %481 = vmatpush.msra.mxu0 0.0
  %482 = vmatpush.msra.mxu0 0.0
  %483 = vmatpush.msra.mxu0 0.0
  %484 = vmatpush.msra.mxu0 0.0
  %485 = vmatpush.msra.mxu0 0.0
  %486 = vmatpush.msra.mxu0 0.0
  %487 = vmatpush.msra.mxu0 0.0
  %488 = vmatpush.msra.mxu0 0.0
  %489 = vmatpush.msra.mxu0 0.0
  %490 = vmatpush.msra.mxu0 0.0
  %491 = vmatpush.msra.mxu0 %v23
  %492 = vmatpush.msra.mxu0 %v22
  %493 = vmatpush.msra.mxu0 %v21
  %494 = vmatpush.msra.mxu0 %v20
  %495 = vmatmul.f32.gmra.mxu0 %v477
  %v496 = vpop.f32.mrf.mxu0
  %v497 = vadd.f32 0.0, %v496
  %498 = vdwg.mxu0
  %v499 = vadd.f32 %v473, %v497
  %v500 = vxor.u32 %v499, 2147483648
  %v501 = vmul.f32 %v500, 1.442695
  %v502 = vpow.pop %v501
  %v503 = vadd.f32 %v502, 1.0
  %v504 = vrcp.pop %v503
  %v505 = vmul.f32 %v503, %v504
  %v506 = vsub.f32 1.0, %v505
  %v507 = vmul.f32 %v504, %v506
  %v508 = vadd.f32 %v504, %v507
  %vm509 = vweird.f32 %v503
  %vm510 = vweird.f32 %v504
  %vm511 = vmor %vm509, %vm510
  %v512 = vsel %vm511, %v504, %v508
  %v513 = vand.u32 2147483647, %v503
  %vm514 = vcmp.eq.f32.partialorder %v513, 8.507059e+37
  %v515 = vand.u32 %v503, 2147483648
  %v516 = vor.u32 1.1754944e-38, %v515
  %v517 = vsel %vm514, %v516, %v512
  %v518 = vmul.f32 1.0, %v517
  %519 = vmatpush.msra.mxu0 0.0
  %520 = vmatpush.msra.mxu0 0.0
  %521 = vmatpush.msra.mxu0 0.0
  %522 = vmatpush.msra.mxu0 0.0
  %523 = vmatpush.msra.mxu0 0.0
  %524 = vmatpush.msra.mxu0 0.0
  %525 = vmatpush.msra.mxu0 0.0
  %526 = vmatpush.msra.mxu0 0.0
  %527 = vmatpush.msra.mxu0 0.0
  %528 = vmatpush.msra.mxu0 0.0
  %529 = vmatpush.msra.mxu0 0.0
  %530 = vmatpush.msra.mxu0 0.0
  %531 = vmatpush.msra.mxu0 %v85
  %532 = vmatpush.msra.mxu0 %v83
  %533 = vmatpush.msra.mxu0 %v81
  %534 = vmatpush.msra.mxu0 %v79
  %535 = vmatmul.f32.gmra.mxu0 %v477
  %v536 = vpop.f32.mrf.mxu0
  %v537 = vadd.f32 %v72, %v536
  %538 = vdwg.mxu0
  %v539 = vmul.f32 %v518, %v537
  %541 = vrot.lane.b32.xlu0 %v539, 64
  %v542 = vpop.permute.xlu0 %541
  %v544 = vadd.f32 %v473, %v542
  %v545 = vtanh.pop %v544
  %v546 = vsub.f32 %v471, %v545
  %548 = vrot.lane.b32.xlu0 %v546, 96
  %v549 = vpop.permute.xlu0 %548
  %v551 = vmul.f32 %v518, %v549
  %553 = vrot.lane.b32.xlu0 %v551, 32
  %v554 = vpop.permute.xlu0 %553
  %v556 = vadd.f32 %v545, %v554
  %s557 = scalar_lea.vmem %s0, 12
  %v558 = vld [vmem:[%s557] sm:$0x3]
  %560 = vrot.lane.b32.xlu0 %v556, 64
  %v561 = vpop.permute.xlu0 %560
  %v562 = vsel %vm27, %v561, 0
  %564 = vmatpush.msra.mxu0 0.0
  %565 = vmatpush.msra.mxu0 0.0
  %566 = vmatpush.msra.mxu0 0.0
  %567 = vmatpush.msra.mxu0 0.0
  %568 = vmatpush.msra.mxu0 0.0
  %569 = vmatpush.msra.mxu0 0.0
  %570 = vmatpush.msra.mxu0 0.0
  %571 = vmatpush.msra.mxu0 0.0
  %572 = vmatpush.msra.mxu0 0.0
  %573 = vmatpush.msra.mxu0 0.0
  %574 = vmatpush.msra.mxu0 0.0
  %575 = vmatpush.msra.mxu0 0.0
  %576 = vmatpush.msra.mxu0 %v23
  %577 = vmatpush.msra.mxu0 %v22
  %578 = vmatpush.msra.mxu0 %v21
  %579 = vmatpush.msra.mxu0 %v20
  %580 = vmatmul.f32.gmra.mxu0 %v562
  %v581 = vpop.f32.mrf.mxu0
  %v582 = vadd.f32 0.0, %v581
  %583 = vdwg.mxu0
  %v584 = vadd.f32 %v558, %v582
  %v585 = vxor.u32 %v584, 2147483648
  %v586 = vmul.f32 %v585, 1.442695
  %v587 = vpow.pop %v586
  %v588 = vadd.f32 %v587, 1.0
  %v589 = vrcp.pop %v588
  %v590 = vmul.f32 %v588, %v589
  %v591 = vsub.f32 1.0, %v590
  %v592 = vmul.f32 %v589, %v591
  %v593 = vadd.f32 %v589, %v592
  %vm594 = vweird.f32 %v588
  %vm595 = vweird.f32 %v589
  %vm596 = vmor %vm594, %vm595
  %v597 = vsel %vm596, %v589, %v593
  %v598 = vand.u32 2147483647, %v588
  %vm599 = vcmp.eq.f32.partialorder %v598, 8.507059e+37
  %v600 = vand.u32 %v588, 2147483648
  %v601 = vor.u32 1.1754944e-38, %v600
  %v602 = vsel %vm599, %v601, %v597
  %v603 = vmul.f32 1.0, %v602
  %604 = vmatpush.msra.mxu0 0.0
  %605 = vmatpush.msra.mxu0 0.0
  %606 = vmatpush.msra.mxu0 0.0
  %607 = vmatpush.msra.mxu0 0.0
  %608 = vmatpush.msra.mxu0 0.0
  %609 = vmatpush.msra.mxu0 0.0
  %610 = vmatpush.msra.mxu0 0.0
  %611 = vmatpush.msra.mxu0 0.0
  %612 = vmatpush.msra.mxu0 0.0
  %613 = vmatpush.msra.mxu0 0.0
  %614 = vmatpush.msra.mxu0 0.0
  %615 = vmatpush.msra.mxu0 0.0
  %616 = vmatpush.msra.mxu0 %v85
  %617 = vmatpush.msra.mxu0 %v83
  %618 = vmatpush.msra.mxu0 %v81
  %619 = vmatpush.msra.mxu0 %v79
  %620 = vmatmul.f32.gmra.mxu0 %v562
  %v621 = vpop.f32.mrf.mxu0
  %v622 = vadd.f32 %v72, %v621
  %623 = vdwg.mxu0
  %v624 = vmul.f32 %v603, %v622
  %626 = vrot.lane.b32.xlu0 %v624, 64
  %v627 = vpop.permute.xlu0 %626
  %v629 = vadd.f32 %v558, %v627
  %v630 = vtanh.pop %v629
  %v631 = vsub.f32 %v556, %v630
  %633 = vrot.lane.b32.xlu0 %v631, 96
  %v634 = vpop.permute.xlu0 %633
  %v636 = vmul.f32 %v603, %v634
  %638 = vrot.lane.b32.xlu0 %v636, 32
  %v639 = vpop.permute.xlu0 %638
  %v641 = vadd.f32 %v630, %v639
  %s642 = scalar_lea.vmem %s0, 14
  %v643 = vld [vmem:[%s642] sm:$0x3]
  %645 = vrot.lane.b32.xlu0 %v641, 64
  %v646 = vpop.permute.xlu0 %645
  %v647 = vsel %vm27, %v646, 0
  %649 = vmatpush.msra.mxu0 0.0
  %650 = vmatpush.msra.mxu0 0.0
  %651 = vmatpush.msra.mxu0 0.0
  %652 = vmatpush.msra.mxu0 0.0
  %653 = vmatpush.msra.mxu0 0.0
  %654 = vmatpush.msra.mxu0 0.0
  %655 = vmatpush.msra.mxu0 0.0
  %656 = vmatpush.msra.mxu0 0.0
  %657 = vmatpush.msra.mxu0 0.0
  %658 = vmatpush.msra.mxu0 0.0
  %659 = vmatpush.msra.mxu0 0.0
  %660 = vmatpush.msra.mxu0 0.0
  %661 = vmatpush.msra.mxu0 %v23
  %662 = vmatpush.msra.mxu0 %v22
  %663 = vmatpush.msra.mxu0 %v21
  %664 = vmatpush.msra.mxu0 %v20
  %665 = vmatmul.f32.gmra.mxu0 %v647
  %v666 = vpop.f32.mrf.mxu0
  %v667 = vadd.f32 0.0, %v666
  %668 = vdwg.mxu0
  %v669 = vadd.f32 %v643, %v667
  %v670 = vxor.u32 %v669, 2147483648
  %v671 = vmul.f32 %v670, 1.442695
  %v672 = vpow.pop %v671
  %v673 = vadd.f32 %v672, 1.0
  %v674 = vrcp.pop %v673
  %v675 = vmul.f32 %v673, %v674
  %v676 = vsub.f32 1.0, %v675
  %v677 = vmul.f32 %v674, %v676
  %v678 = vadd.f32 %v674, %v677
  %vm679 = vweird.f32 %v673
  %vm680 = vweird.f32 %v674
  %vm681 = vmor %vm679, %vm680
  %v682 = vsel %vm681, %v674, %v678
  %v683 = vand.u32 2147483647, %v673
  %vm684 = vcmp.eq.f32.partialorder %v683, 8.507059e+37
  %v685 = vand.u32 %v673, 2147483648
  %v686 = vor.u32 1.1754944e-38, %v685
  %v687 = vsel %vm684, %v686, %v682
  %v688 = vmul.f32 1.0, %v687
  %689 = vmatpush.msra.mxu0 0.0
  %690 = vmatpush.msra.mxu0 0.0
  %691 = vmatpush.msra.mxu0 0.0
  %692 = vmatpush.msra.mxu0 0.0
  %693 = vmatpush.msra.mxu0 0.0
  %694 = vmatpush.msra.mxu0 0.0
  %695 = vmatpush.msra.mxu0 0.0
  %696 = vmatpush.msra.mxu0 0.0
  %697 = vmatpush.msra.mxu0 0.0
  %698 = vmatpush.msra.mxu0 0.0
  %699 = vmatpush.msra.mxu0 0.0
  %700 = vmatpush.msra.mxu0 0.0
  %701 = vmatpush.msra.mxu0 %v85
  %702 = vmatpush.msra.mxu0 %v83
  %703 = vmatpush.msra.mxu0 %v81
  %704 = vmatpush.msra.mxu0 %v79
  %705 = vmatmul.f32.gmra.mxu0 %v647
  %v706 = vpop.f32.mrf.mxu0
  %v707 = vadd.f32 %v72, %v706
  %708 = vdwg.mxu0
  %v709 = vmul.f32 %v688, %v707
  %711 = vrot.lane.b32.xlu0 %v709, 64
  %v712 = vpop.permute.xlu0 %711
  %v714 = vadd.f32 %v643, %v712
  %v715 = vtanh.pop %v714
  %v716 = vsub.f32 %v641, %v715
  %718 = vrot.lane.b32.xlu0 %v716, 96
  %v719 = vpop.permute.xlu0 %718
  %v721 = vmul.f32 %v688, %v719
  %723 = vrot.lane.b32.xlu0 %v721, 32
  %v724 = vpop.permute.xlu0 %723
  %v726 = vadd.f32 %v715, %v724
  %728 = vrot.lane.b32.xlu0 %v216, 96
  %v729 = vpop.permute.xlu0 %728
  %731 = vrot.lane.b32.xlu0 %v386, 32
  %v732 = vpop.permute.xlu0 %731
  %735 = vrot.lane.b32.xlu0 %v556, 96
  %v736 = vpop.permute.xlu0 %735
  %739 = vrot.lane.b32.xlu0 %v726, 32
  %v740 = vpop.permute.xlu0 %739
  %v742 = vsel %vm27, %v136, %v729
  %vm743 = vcmask 523264
  %v744 = vsel %vm743, %v742, %v301
  %vm745 = vcmask 785408
  %v746 = vsel %vm745, %v744, %v732
  %v747 = vsel %vm27, %v476, %v736
  %v748 = vsel %vm743, %v747, %v641
  %v749 = vsel %vm745, %v748, %v740
  %v752 = vrot.slane %v749, 6
  %vm753 = vcmask 1041408
  %v754 = vsel %vm753, %v746, %v752
  %756 = vst [vmem:[%s3] sm:$0xf] %v754
  %757 = vrot.lane.b32.xlu0 %v726, 64
  %v758 = vpop.permute.xlu0 %757
  %vm760 = vcmask 254976
  %761 = vst.msk [vmem:[#allocation2] sm:$0x3] %vm760, %v758
  // Predicated region
  $region18: #{_lambda_.1} parent=0 // pred_check
    _
  $region19: #{_lambda_.1} parent=0 // pred_check_branch
    %763 = sbr.rel (0) target = $region21
  $region20: #{_lambda_.1} parent=0 // pred_region
    _
  $region21: #{_lambda_.1} parent=0 // pred_fallthru
    _
  // Predicated region
  $region22: #{_lambda_.1} parent=0 // pred_check
    _
  $region23: #{_lambda_.1} parent=0 // pred_check_branch
    %765 = sbr.rel (0) target = $region25
  $region24: #{_lambda_.1} parent=0 // pred_region
    _
  $region25: #{_lambda_.1} parent=0 // pred_fallthru
    _

</llo_original>
